<compile_context>
chip_gen: v5e
topology: v5e:2x2
jax: 0.10.0
libtpu: 0.0.40
codegen_flags: <defaults>
</compile_context>

<pallas_src>
import functools
import math

import jax
import jax.numpy as jnp
import numpy as np
from jax.experimental import pallas as pl
from jax.experimental.pallas import tpu as pltpu


# ----------------------------------------------------------------------------
# Single fused kernel: QKV projection + per-head attention + projection + residual
# ----------------------------------------------------------------------------
def _fused_kernel(hid_ref, inp_ref, sel_ref, wh_ref, wi_ref, b_ref, wp_ref, bp_ref,
                  o_ref, qkv_ref, *, T, B, H, d):
    C = H * d

    # ---- fused QKV projection -------------------------------------------
    # concat([hidden, broadcast(inputs)]) @ W_qkv
    #   ==  hidden @ W_h  +  sel @ (inputs @ W_i)            (sel is 0/1, (TB, B))
    inp_c = jnp.dot(inp_ref[...], wi_ref[...],
                    preferred_element_type=jnp.float32)             # (B, 3C)
    qkv = (jnp.dot(hid_ref[...], wh_ref[...],
                   preferred_element_type=jnp.float32)
           + jnp.dot(sel_ref[...], inp_c,
                     preferred_element_type=jnp.float32)
           + b_ref[...])                                            # (T*B, 3C)
    qkv_ref[...] = qkv

    # ---- per-(batch, head) attention, fully unrolled ----------------------
    wp = wp_ref[...]                                    # (d, d), loaded once
    bp = jnp.broadcast_to(bp_ref[...], (T, d))          # bias broadcast hoisted

    row_blocks = []
    for b in range(B):
        r0 = b * T
        head_blocks = []
        for h in range(H):
            c0 = h * d
            # Weights were column-permuted in the wrapper so that the torch
            # .view(B, T, d, H).permute(0, 3, 1, 2) head split is a contiguous
            # (T, d) slice here; q is pre-scaled by 1/sqrt(d).
            q = qkv_ref[r0:r0 + T, c0:c0 + d]                       # (T, d)
            k = qkv_ref[r0:r0 + T, C + c0:C + c0 + d]               # (T, d)
            v = qkv_ref[r0:r0 + T, 2 * C + c0:2 * C + c0 + d]       # (T, d)

            s = jax.lax.dot_general(q, k, (((1,), (1,)), ((), ())),
                                    preferred_element_type=jnp.float32)  # (T, T)
            s = s - jnp.max(s, axis=-1, keepdims=True)
            p = jnp.exp(s)
            p = p * pl.reciprocal(jnp.sum(p, axis=-1, keepdims=True),
                                  approx=True)                       # softmax

            y = jnp.dot(p, v, preferred_element_type=jnp.float32)    # (T, d)
            proj = jnp.dot(y, wp, preferred_element_type=jnp.float32) + bp
            # TODO(synk): att_drop / resid_drop are identity (eval mode).
            head_blocks.append(proj + y)
        row_blocks.append(jnp.concatenate(head_blocks, axis=-1))     # (T, H*d)

    # single lane-dense store of the whole (T*B, H*d) output
    o_ref[...] = jnp.concatenate(row_blocks, axis=0)


# ----------------------------------------------------------------------------
# Forward wrapper: weight prep (head permutation, scale folding) + one pallas_call
# ----------------------------------------------------------------------------
def cross_attention_forward(inputs, hidden_states, params):
    T, B, D_h = hidden_states.shape
    D_i = inputs.shape[-1]
    H = params["n_head"]
    d = params["out_dim"]
    C = H * d
    n_dim = D_h + D_i
    TB = T * B
    scale = 1.0 / math.sqrt(d)

    # Reorder each projection's output columns so head h occupies the contiguous
    # column block [h*d, (h+1)*d):   new col h*d + j   <-   old col j*H + h.
    def head_perm(W_t, bias):                          # W_t: (n_dim, C)
        Wp_ = W_t.reshape(n_dim, d, H).transpose(0, 2, 1).reshape(n_dim, C)
        bp_ = bias.reshape(d, H).T.reshape(C)
        return Wp_, bp_

    Wq_p, bq_p = head_perm(params["Wq"].T, params["bq"])
    Wk_p, bk_p = head_perm(params["Wk"].T, params["bk"])
    Wv_p, bv_p = head_perm(params["Wv"].T, params["bv"])

    # Fold the 1/sqrt(d) attention scale into the query projection.
    W_qkv = jnp.concatenate([Wq_p * scale, Wk_p, Wv_p], axis=1)      # (n_dim, 3C)
    b_qkv = jnp.concatenate([bq_p * scale, bk_p, bv_p])[None, :]     # (1, 3C)
    W_h, W_i = W_qkv[:D_h], W_qkv[D_h:]                              # (D_h,3C),(D_i,3C)

    hidden_flat = hidden_states.reshape(TB, D_h)                     # rows in (t, b) order
    # Row r of the T-broadcast decoder input is inputs[r % B]; expressed as a
    # 0/1 selection matrix so the broadcast happens on the MXU inside the kernel.
    sel = jnp.tile(jnp.eye(B, dtype=jnp.float32), (T, 1))            # (TB, B)

    kernel = functools.partial(_fused_kernel, T=T, B=B, H=H, d=d)

    def full(r, c):
        return pl.BlockSpec((r, c), lambda i: (0, 0))

    out2d = pl.pallas_call(
        kernel,
        grid=(1,),
        in_specs=[
            full(TB, D_h),        # hidden_flat
            full(B, D_i),         # inputs
            full(TB, B),          # sel
            full(D_h, 3 * C),     # W_h
            full(D_i, 3 * C),     # W_i
            full(1, 3 * C),       # b_qkv
            full(d, d),           # Wp (already transposed)
            full(1, d),           # bp
        ],
        out_specs=full(TB, C),
        out_shape=jax.ShapeDtypeStruct((TB, C), jnp.float32),
        scratch_shapes=[pltpu.VMEM((TB, 3 * C), jnp.float32)],
        compiler_params=pltpu.CompilerParams(dimension_semantics=("arbitrary",)),
    )(hidden_flat, inputs, sel, W_h, W_i, b_qkv,
      params["Wp"].T, params["bp"][None, :])

    # out2d[b*T + t, h*d + j] == y[b, h, t, j]  ->  torch output layout (T, H, B, d)
    return out2d.reshape(B, T, H, d).transpose(1, 2, 0, 3)


# ----------------------------------------------------------------------------
# Pure-JAX reference (faithful to the torch module, for correctness check)
# ----------------------------------------------------------------------------
def ref_forward(inputs, hidden_states, params):
    T, B, _ = hidden_states.shape
    H = params["n_head"]
    d = params["out_dim"]

    inp = jnp.broadcast_to(inputs[None, :, :], (T, B, inputs.shape[-1]))
    concat = jnp.concatenate([hidden_states, inp], axis=-1)

    def lin(x, W, b):
        return x @ W.T + b

    def rearrange(z):                        # z: (T, B, C) contiguous
        return z.reshape(B, T, d, H).transpose(0, 3, 1, 2)

    key = rearrange(lin(concat, params["Wk"], params["bk"]))
    query = rearrange(lin(concat, params["Wq"], params["bq"]))
    value = rearrange(lin(concat, params["Wv"], params["bv"]))

    att = jnp.einsum("bhtd,bhsd->bhts", query, key) * (1.0 / math.sqrt(key.shape[-1]))
    att = jax.nn.softmax(att, axis=-1)
    y = jnp.einsum("bhts,bhsd->bhtd", att, value)
    y = (y @ params["Wp"].T + params["bp"]) + y
    return jnp.transpose(y, (2, 1, 0, 3))


# ----------------------------------------------------------------------------
def init_params(key, n_dim, out_dim, n_head):
    C = n_head * out_dim
    keys = jax.random.split(key, 8)

    def lin_init(kw, kb, fan_in, fan_out):
        bound = 1.0 / math.sqrt(fan_in)
        W = jax.random.uniform(kw, (fan_out, fan_in), jnp.float32, -bound, bound)
        b = jax.random.uniform(kb, (fan_out,), jnp.float32, -bound, bound)
        return W, b

    Wq, bq = lin_init(keys[0], keys[1], n_dim, C)
    Wk, bk = lin_init(keys[2], keys[3], n_dim, C)
    Wv, bv = lin_init(keys[4], keys[5], n_dim, C)
    Wp, bp = lin_init(keys[6], keys[7], out_dim, out_dim)
    return dict(Wq=Wq, bq=bq, Wk=Wk, bk=bk, Wv=Wv, bv=bv, Wp=Wp, bp=bp,
                n_head=n_head, out_dim=out_dim)


if __name__ == "__main__":
    # small shapes consistent with the module:
    #   units = 32, num_nodes * output_dim = 16 -> n_dim = 48, out_dim = 16
    T, B = 8, 2
    n_head = 2
    out_dim = 16
    D_h = 32                      # hidden_states feature dim ("N * units")
    D_i = out_dim                 # inputs feature dim ("N * output_dim")
    n_dim = D_h + D_i             # concat feature dim seen by the Linear layers

    root = jax.random.PRNGKey(0)
    k_in, k_hid, k_par = jax.random.split(root, 3)

    inputs = jax.random.normal(k_in, (B, D_i), dtype=jnp.float32)
    hidden_states = jax.random.normal(k_hid, (T, B, D_h), dtype=jnp.float32)
    params = init_params(k_par, n_dim, out_dim, n_head)

    fwd = jax.jit(lambda i, h: cross_attention_forward(i, h, params))
    out = jax.block_until_ready(fwd(inputs, hidden_states))

    ref = jax.block_until_ready(ref_forward(inputs, hidden_states, params))
    assert out.shape == (T, n_head, B, out_dim), out.shape
    # Tolerance budget covers the EUP approx reciprocal used in the softmax
    # normalisation (relative error well below 1e-3 on f32 data of O(1) scale).
    np.testing.assert_allclose(np.asarray(out), np.asarray(ref),
                               rtol=2e-3, atol=2e-3)

    print("KERNEL_OK")
</pallas_src>

<mosaic_0001>
module attributes {stable_mosaic.version = 11 : i64} {
  func.func @_fused_kernel(%arg0: i32, %arg1: memref<16x32xf32, #tpu.memory_space<vmem>>, %arg2: memref<2x16xf32, #tpu.memory_space<vmem>>, %arg3: memref<16x2xf32, #tpu.memory_space<vmem>>, %arg4: memref<32x96xf32, #tpu.memory_space<vmem>>, %arg5: memref<16x96xf32, #tpu.memory_space<vmem>>, %arg6: memref<1x96xf32, #tpu.memory_space<vmem>>, %arg7: memref<16x16xf32, #tpu.memory_space<vmem>>, %arg8: memref<1x16xf32, #tpu.memory_space<vmem>>, %arg9: memref<16x32xf32, #tpu.memory_space<vmem>>, %arg10: memref<16x96xf32, #tpu.memory_space<vmem>>) attributes {dimension_semantics = [#tpu.dimension_semantics<arbitrary>], iteration_bounds = array<i64: 1>, scalar_prefetch = 0 : i64, scratch_operands = 1 : i64, tpu.core_type = #tpu.core_type<tc>, window_params = [{pipeline_mode = #tpu.pipeline_mode<synchronous>, transform_indices = @transform_0, window_bounds = array<i64: 16, 32>}, {pipeline_mode = #tpu.pipeline_mode<synchronous>, transform_indices = @transform_1, window_bounds = array<i64: 2, 16>}, {pipeline_mode = #tpu.pipeline_mode<synchronous>, transform_indices = @transform_2, window_bounds = array<i64: 16, 2>}, {pipeline_mode = #tpu.pipeline_mode<synchronous>, transform_indices = @transform_3, window_bounds = array<i64: 32, 96>}, {pipeline_mode = #tpu.pipeline_mode<synchronous>, transform_indices = @transform_4, window_bounds = array<i64: 16, 96>}, {pipeline_mode = #tpu.pipeline_mode<synchronous>, transform_indices = @transform_5, window_bounds = array<i64: 1, 96>}, {pipeline_mode = #tpu.pipeline_mode<synchronous>, transform_indices = @transform_6, window_bounds = array<i64: 16, 16>}, {pipeline_mode = #tpu.pipeline_mode<synchronous>, transform_indices = @transform_7, window_bounds = array<i64: 1, 16>}, {pipeline_mode = #tpu.pipeline_mode<synchronous>, transform_indices = @transform_8, window_bounds = array<i64: 16, 32>}]} {
    %c0 = arith.constant 0 : index
    %c0_0 = arith.constant 0 : index
    %0 = vector.load %arg2[%c0, %c0_0] : memref<2x16xf32, #tpu.memory_space<vmem>>, vector<2x16xf32>
    %c0_1 = arith.constant 0 : index
    %c0_2 = arith.constant 0 : index
    %1 = vector.load %arg5[%c0_1, %c0_2] : memref<16x96xf32, #tpu.memory_space<vmem>>, vector<16x96xf32>
    %cst = arith.constant dense<0.000000e+00> : vector<2x96xf32>
    %2 = tpu.matmul %0, %1, %cst {dimension_numbers = #tpu.dot_dimension_numbers<[1], [0], [0], [1], [0, 0, 1, 1], [], []>} : vector<2x16xf32>, vector<16x96xf32>, vector<2x96xf32> -> vector<2x96xf32>
    %c0_3 = arith.constant 0 : index
    %c0_4 = arith.constant 0 : index
    %3 = vector.load %arg1[%c0_3, %c0_4] : memref<16x32xf32, #tpu.memory_space<vmem>>, vector<16x32xf32>
    %c0_5 = arith.constant 0 : index
    %c0_6 = arith.constant 0 : index
    %4 = vector.load %arg4[%c0_5, %c0_6] : memref<32x96xf32, #tpu.memory_space<vmem>>, vector<32x96xf32>
    %cst_7 = arith.constant dense<0.000000e+00> : vector<16x96xf32>
    %5 = tpu.matmul %3, %4, %cst_7 {dimension_numbers = #tpu.dot_dimension_numbers<[1], [0], [0], [1], [0, 0, 1, 1], [], []>} : vector<16x32xf32>, vector<32x96xf32>, vector<16x96xf32> -> vector<16x96xf32>
    %c0_8 = arith.constant 0 : index
    %c0_9 = arith.constant 0 : index
    %6 = vector.load %arg3[%c0_8, %c0_9] : memref<16x2xf32, #tpu.memory_space<vmem>>, vector<16x2xf32>
    %cst_10 = arith.constant dense<0.000000e+00> : vector<16x96xf32>
    %7 = tpu.matmul %6, %2, %cst_10 {dimension_numbers = #tpu.dot_dimension_numbers<[1], [0], [0], [1], [0, 0, 1, 1], [], []>} : vector<16x2xf32>, vector<2x96xf32>, vector<16x96xf32> -> vector<16x96xf32>
    %8 = arith.addf %5, %7 : vector<16x96xf32>
    %c0_11 = arith.constant 0 : index
    %c0_12 = arith.constant 0 : index
    %9 = vector.load %arg6[%c0_11, %c0_12] : memref<1x96xf32, #tpu.memory_space<vmem>>, vector<1x96xf32>
    %10 = vector.broadcast %9 : vector<1x96xf32> to vector<16x96xf32>
    %11 = arith.addf %8, %10 : vector<16x96xf32>
    %c0_13 = arith.constant 0 : index
    %c0_14 = arith.constant 0 : index
    %12 = vector.load %arg10[%c0_13, %c0_14] : memref<16x96xf32, #tpu.memory_space<vmem>>, vector<16x96xf32>
    tpu.vector_store %arg10[%c0_13, %c0_14], %11 {strides = array<i32>} : memref<16x96xf32, #tpu.memory_space<vmem>>, vector<16x96xf32>,
    %c0_15 = arith.constant 0 : index
    %c0_16 = arith.constant 0 : index
    %13 = vector.load %arg7[%c0_15, %c0_16] : memref<16x16xf32, #tpu.memory_space<vmem>>, vector<16x16xf32>
    %c0_17 = arith.constant 0 : index
    %c0_18 = arith.constant 0 : index
    %14 = vector.load %arg8[%c0_17, %c0_18] : memref<1x16xf32, #tpu.memory_space<vmem>>, vector<1x16xf32>
    %15 = vector.shape_cast %14 : vector<1x16xf32> to vector<1x16xf32>
    %16 = vector.broadcast %15 : vector<1x16xf32> to vector<8x16xf32>
    %c0_19 = arith.constant 0 : index
    %c0_20 = arith.constant 0 : index
    %17 = vector.load %arg10[%c0_19, %c0_20] : memref<16x96xf32, #tpu.memory_space<vmem>>, vector<8x16xf32>
    %c0_21 = arith.constant 0 : index
    %c32 = arith.constant 32 : index
    %18 = vector.load %arg10[%c0_21, %c32] : memref<16x96xf32, #tpu.memory_space<vmem>>, vector<8x16xf32>
    %c0_22 = arith.constant 0 : index
    %c64 = arith.constant 64 : index
    %19 = vector.load %arg10[%c0_22, %c64] : memref<16x96xf32, #tpu.memory_space<vmem>>, vector<8x16xf32>
    %cst_23 = arith.constant dense<0.000000e+00> : vector<8x8xf32>
    %20 = tpu.matmul %17, %18, %cst_23 {dimension_numbers = #tpu.dot_dimension_numbers<[1], [1], [0], [0], [0, 0, 1, 0], [], []>} : vector<8x16xf32>, vector<8x16xf32>, vector<8x8xf32> -> vector<8x8xf32>
    %cst_24 = arith.constant dense<0xFF800000> : vector<8xf32>
    %21 = vector.multi_reduction <maximumf>, %20, %cst_24 [1] : vector<8x8xf32> to vector<8xf32>
    %22 = vector.shape_cast %21 : vector<8xf32> to vector<8x1xf32>
    %23 = vector.broadcast %22 : vector<8x1xf32> to vector<8x8xf32>
    %24 = arith.subf %20, %23 : vector<8x8xf32>
    %25 = math.exp %24 : vector<8x8xf32>
    %cst_25 = arith.constant dense<0.000000e+00> : vector<8xf32>
    %26 = vector.multi_reduction <add>, %25, %cst_25 [1] : vector<8x8xf32> to vector<8xf32>
    %27 = vector.shape_cast %26 : vector<8xf32> to vector<8x1xf32>
    %28 = tpu.reciprocal %27 {approx = true} : vector<8x1xf32> -> vector<8x1xf32>
    %29 = vector.broadcast %28 : vector<8x1xf32> to vector<8x8xf32>
    %30 = arith.mulf %25, %29 : vector<8x8xf32>
    %cst_26 = arith.constant dense<0.000000e+00> : vector<8x16xf32>
    %31 = tpu.matmul %30, %19, %cst_26 {dimension_numbers = #tpu.dot_dimension_numbers<[1], [0], [0], [1], [0, 0, 1, 1], [], []>} : vector<8x8xf32>, vector<8x16xf32>, vector<8x16xf32> -> vector<8x16xf32>
    %cst_27 = arith.constant dense<0.000000e+00> : vector<8x16xf32>
    %32 = tpu.matmul %31, %13, %cst_27 {dimension_numbers = #tpu.dot_dimension_numbers<[1], [0], [0], [1], [0, 0, 1, 1], [], []>} : vector<8x16xf32>, vector<16x16xf32>, vector<8x16xf32> -> vector<8x16xf32>
    %33 = arith.addf %32, %16 : vector<8x16xf32>
    %34 = arith.addf %33, %31 : vector<8x16xf32>
    %c0_28 = arith.constant 0 : index
    %c16 = arith.constant 16 : index
    %35 = vector.load %arg10[%c0_28, %c16] : memref<16x96xf32, #tpu.memory_space<vmem>>, vector<8x16xf32>
    %c0_29 = arith.constant 0 : index
    %c48 = arith.constant 48 : index
    %36 = vector.load %arg10[%c0_29, %c48] : memref<16x96xf32, #tpu.memory_space<vmem>>, vector<8x16xf32>
    %c0_30 = arith.constant 0 : index
    %c80 = arith.constant 80 : index
    %37 = vector.load %arg10[%c0_30, %c80] : memref<16x96xf32, #tpu.memory_space<vmem>>, vector<8x16xf32>
    %cst_31 = arith.constant dense<0.000000e+00> : vector<8x8xf32>
    %38 = tpu.matmul %35, %36, %cst_31 {dimension_numbers = #tpu.dot_dimension_numbers<[1], [1], [0], [0], [0, 0, 1, 0], [], []>} : vector<8x16xf32>, vector<8x16xf32>, vector<8x8xf32> -> vector<8x8xf32>
    %cst_32 = arith.constant dense<0xFF800000> : vector<8xf32>
    %39 = vector.multi_reduction <maximumf>, %38, %cst_32 [1] : vector<8x8xf32> to vector<8xf32>
    %40 = vector.shape_cast %39 : vector<8xf32> to vector<8x1xf32>
    %41 = vector.broadcast %40 : vector<8x1xf32> to vector<8x8xf32>
    %42 = arith.subf %38, %41 : vector<8x8xf32>
    %43 = math.exp %42 : vector<8x8xf32>
    %cst_33 = arith.constant dense<0.000000e+00> : vector<8xf32>
    %44 = vector.multi_reduction <add>, %43, %cst_33 [1] : vector<8x8xf32> to vector<8xf32>
    %45 = vector.shape_cast %44 : vector<8xf32> to vector<8x1xf32>
    %46 = tpu.reciprocal %45 {approx = true} : vector<8x1xf32> -> vector<8x1xf32>
    %47 = vector.broadcast %46 : vector<8x1xf32> to vector<8x8xf32>
    %48 = arith.mulf %43, %47 : vector<8x8xf32>
    %cst_34 = arith.constant dense<0.000000e+00> : vector<8x16xf32>
    %49 = tpu.matmul %48, %37, %cst_34 {dimension_numbers = #tpu.dot_dimension_numbers<[1], [0], [0], [1], [0, 0, 1, 1], [], []>} : vector<8x8xf32>, vector<8x16xf32>, vector<8x16xf32> -> vector<8x16xf32>
    %cst_35 = arith.constant dense<0.000000e+00> : vector<8x16xf32>
    %50 = tpu.matmul %49, %13, %cst_35 {dimension_numbers = #tpu.dot_dimension_numbers<[1], [0], [0], [1], [0, 0, 1, 1], [], []>} : vector<8x16xf32>, vector<16x16xf32>, vector<8x16xf32> -> vector<8x16xf32>
    %51 = arith.addf %50, %16 : vector<8x16xf32>
    %52 = arith.addf %51, %49 : vector<8x16xf32>
    %53 = tpu.concatenate %34, %52 in 1 : vector<8x16xf32>, vector<8x16xf32> -> vector<8x32xf32>
    %c8 = arith.constant 8 : index
    %c0_36 = arith.constant 0 : index
    %54 = vector.load %arg10[%c8, %c0_36] : memref<16x96xf32, #tpu.memory_space<vmem>>, vector<8x16xf32>
    %c8_37 = arith.constant 8 : index
    %c32_38 = arith.constant 32 : index
    %55 = vector.load %arg10[%c8_37, %c32_38] : memref<16x96xf32, #tpu.memory_space<vmem>>, vector<8x16xf32>
    %c8_39 = arith.constant 8 : index
    %c64_40 = arith.constant 64 : index
    %56 = vector.load %arg10[%c8_39, %c64_40] : memref<16x96xf32, #tpu.memory_space<vmem>>, vector<8x16xf32>
    %cst_41 = arith.constant dense<0.000000e+00> : vector<8x8xf32>
    %57 = tpu.matmul %54, %55, %cst_41 {dimension_numbers = #tpu.dot_dimension_numbers<[1], [1], [0], [0], [0, 0, 1, 0], [], []>} : vector<8x16xf32>, vector<8x16xf32>, vector<8x8xf32> -> vector<8x8xf32>
    %cst_42 = arith.constant dense<0xFF800000> : vector<8xf32>
    %58 = vector.multi_reduction <maximumf>, %57, %cst_42 [1] : vector<8x8xf32> to vector<8xf32>
    %59 = vector.shape_cast %58 : vector<8xf32> to vector<8x1xf32>
    %60 = vector.broadcast %59 : vector<8x1xf32> to vector<8x8xf32>
    %61 = arith.subf %57, %60 : vector<8x8xf32>
    %62 = math.exp %61 : vector<8x8xf32>
    %cst_43 = arith.constant dense<0.000000e+00> : vector<8xf32>
    %63 = vector.multi_reduction <add>, %62, %cst_43 [1] : vector<8x8xf32> to vector<8xf32>
    %64 = vector.shape_cast %63 : vector<8xf32> to vector<8x1xf32>
    %65 = tpu.reciprocal %64 {approx = true} : vector<8x1xf32> -> vector<8x1xf32>
    %66 = vector.broadcast %65 : vector<8x1xf32> to vector<8x8xf32>
    %67 = arith.mulf %62, %66 : vector<8x8xf32>
    %cst_44 = arith.constant dense<0.000000e+00> : vector<8x16xf32>
    %68 = tpu.matmul %67, %56, %cst_44 {dimension_numbers = #tpu.dot_dimension_numbers<[1], [0], [0], [1], [0, 0, 1, 1], [], []>} : vector<8x8xf32>, vector<8x16xf32>, vector<8x16xf32> -> vector<8x16xf32>
    %cst_45 = arith.constant dense<0.000000e+00> : vector<8x16xf32>
    %69 = tpu.matmul %68, %13, %cst_45 {dimension_numbers = #tpu.dot_dimension_numbers<[1], [0], [0], [1], [0, 0, 1, 1], [], []>} : vector<8x16xf32>, vector<16x16xf32>, vector<8x16xf32> -> vector<8x16xf32>
    %70 = arith.addf %69, %16 : vector<8x16xf32>
    %71 = arith.addf %70, %68 : vector<8x16xf32>
    %c8_46 = arith.constant 8 : index
    %c16_47 = arith.constant 16 : index
    %72 = vector.load %arg10[%c8_46, %c16_47] : memref<16x96xf32, #tpu.memory_space<vmem>>, vector<8x16xf32>
    %c8_48 = arith.constant 8 : index
    %c48_49 = arith.constant 48 : index
    %73 = vector.load %arg10[%c8_48, %c48_49] : memref<16x96xf32, #tpu.memory_space<vmem>>, vector<8x16xf32>
    %c8_50 = arith.constant 8 : index
    %c80_51 = arith.constant 80 : index
    %74 = vector.load %arg10[%c8_50, %c80_51] : memref<16x96xf32, #tpu.memory_space<vmem>>, vector<8x16xf32>
    %cst_52 = arith.constant dense<0.000000e+00> : vector<8x8xf32>
    %75 = tpu.matmul %72, %73, %cst_52 {dimension_numbers = #tpu.dot_dimension_numbers<[1], [1], [0], [0], [0, 0, 1, 0], [], []>} : vector<8x16xf32>, vector<8x16xf32>, vector<8x8xf32> -> vector<8x8xf32>
    %cst_53 = arith.constant dense<0xFF800000> : vector<8xf32>
    %76 = vector.multi_reduction <maximumf>, %75, %cst_53 [1] : vector<8x8xf32> to vector<8xf32>
    %77 = vector.shape_cast %76 : vector<8xf32> to vector<8x1xf32>
    %78 = vector.broadcast %77 : vector<8x1xf32> to vector<8x8xf32>
    %79 = arith.subf %75, %78 : vector<8x8xf32>
    %80 = math.exp %79 : vector<8x8xf32>
    %cst_54 = arith.constant dense<0.000000e+00> : vector<8xf32>
    %81 = vector.multi_reduction <add>, %80, %cst_54 [1] : vector<8x8xf32> to vector<8xf32>
    %82 = vector.shape_cast %81 : vector<8xf32> to vector<8x1xf32>
    %83 = tpu.reciprocal %82 {approx = true} : vector<8x1xf32> -> vector<8x1xf32>
    %84 = vector.broadcast %83 : vector<8x1xf32> to vector<8x8xf32>
    %85 = arith.mulf %80, %84 : vector<8x8xf32>
    %cst_55 = arith.constant dense<0.000000e+00> : vector<8x16xf32>
    %86 = tpu.matmul %85, %74, %cst_55 {dimension_numbers = #tpu.dot_dimension_numbers<[1], [0], [0], [1], [0, 0, 1, 1], [], []>} : vector<8x8xf32>, vector<8x16xf32>, vector<8x16xf32> -> vector<8x16xf32>
    %cst_56 = arith.constant dense<0.000000e+00> : vector<8x16xf32>
    %87 = tpu.matmul %86, %13, %cst_56 {dimension_numbers = #tpu.dot_dimension_numbers<[1], [0], [0], [1], [0, 0, 1, 1], [], []>} : vector<8x16xf32>, vector<16x16xf32>, vector<8x16xf32> -> vector<8x16xf32>
    %88 = arith.addf %87, %16 : vector<8x16xf32>
    %89 = arith.addf %88, %86 : vector<8x16xf32>
    %90 = tpu.concatenate %71, %89 in 1 : vector<8x16xf32>, vector<8x16xf32> -> vector<8x32xf32>
    %91 = tpu.concatenate %53, %90 in 0 : vector<8x32xf32>, vector<8x32xf32> -> vector<16x32xf32>
    %c0_57 = arith.constant 0 : index
    %c0_58 = arith.constant 0 : index
    %92 = vector.load %arg9[%c0_57, %c0_58] : memref<16x32xf32, #tpu.memory_space<vmem>>, vector<16x32xf32>
    tpu.vector_store %arg9[%c0_57, %c0_58], %91 {strides = array<i32>} : memref<16x32xf32, #tpu.memory_space<vmem>>, vector<16x32xf32>,
    return
  }
  func.func @transform_0(%arg0: i32) -> (i32, i32) {
    %c0_i32 = arith.constant 0 : i32
    %c0_i32_0 = arith.constant 0 : i32
    %c0_i32_1 = arith.constant 0 : i32
    return %c0_i32, %c0_i32_0 : i32, i32
  }
  func.func @transform_1(%arg0: i32) -> (i32, i32) {
    %c0_i32 = arith.constant 0 : i32
    %c0_i32_0 = arith.constant 0 : i32
    %c0_i32_1 = arith.constant 0 : i32
    return %c0_i32, %c0_i32_0 : i32, i32
  }
  func.func @transform_2(%arg0: i32) -> (i32, i32) {
    %c0_i32 = arith.constant 0 : i32
    %c0_i32_0 = arith.constant 0 : i32
    %c0_i32_1 = arith.constant 0 : i32
    return %c0_i32, %c0_i32_0 : i32, i32
  }
  func.func @transform_3(%arg0: i32) -> (i32, i32) {
    %c0_i32 = arith.constant 0 : i32
    %c0_i32_0 = arith.constant 0 : i32
    %c0_i32_1 = arith.constant 0 : i32
    return %c0_i32, %c0_i32_0 : i32, i32
  }
  func.func @transform_4(%arg0: i32) -> (i32, i32) {
    %c0_i32 = arith.constant 0 : i32
    %c0_i32_0 = arith.constant 0 : i32
    %c0_i32_1 = arith.constant 0 : i32
    return %c0_i32, %c0_i32_0 : i32, i32
  }
  func.func @transform_5(%arg0: i32) -> (i32, i32) {
    %c0_i32 = arith.constant 0 : i32
    %c0_i32_0 = arith.constant 0 : i32
    %c0_i32_1 = arith.constant 0 : i32
    return %c0_i32, %c0_i32_0 : i32, i32
  }
  func.func @transform_6(%arg0: i32) -> (i32, i32) {
    %c0_i32 = arith.constant 0 : i32
    %c0_i32_0 = arith.constant 0 : i32
    %c0_i32_1 = arith.constant 0 : i32
    return %c0_i32, %c0_i32_0 : i32, i32
  }
  func.func @transform_7(%arg0: i32) -> (i32, i32) {
    %c0_i32 = arith.constant 0 : i32
    %c0_i32_0 = arith.constant 0 : i32
    %c0_i32_1 = arith.constant 0 : i32
    return %c0_i32, %c0_i32_0 : i32, i32
  }
  func.func @transform_8(%arg0: i32) -> (i32, i32) {
    %c0_i32 = arith.constant 0 : i32
    %c0_i32_0 = arith.constant 0 : i32
    %c0_i32_1 = arith.constant 0 : i32
    return %c0_i32, %c0_i32_0 : i32, i32
  }
}

</mosaic_0001>

<llo_original>
// kernel: _lambda_.1
$region0: #{_lambda_.1}
  #allocation0 [shape = 'u32[]', space=smem, size = 0x4, offset = 0x4, fixed_abs, tag = 'smem constant byte address 0x4 - core index']
  #allocation1 [shape = 'u32[72,128]{1,0:T(1,128)}', space=vmem, size = 0x9000, scoped, tag = 'internal scratch']
  #allocation2 [shape = 'f32[16,96]{1,0:T(8,128)}', space=vmem, size = 0x2000, scoped, tag = 'scratch operand']
  %s0 = inlined_call_operand.vmem [shape: f32[16,32], index: 0, kind: input, shape index: {}]
  %s1 = inlined_call_operand.vmem [shape: f32[2,16], index: 1, kind: input, shape index: {}]
  %s2 = inlined_call_operand.vmem [shape: f32[16,2], index: 2, kind: input, shape index: {}]
  %s3 = inlined_call_operand.hbm [shape: f32[32,96], index: 3, kind: input, shape index: {}]
  %s4 = inlined_call_operand.hbm [shape: f32[16,96], index: 4, kind: input, shape index: {}]
  %s5 = inlined_call_operand.vmem [shape: f32[1,96], index: 5, kind: input, shape index: {}]
  %s6 = inlined_call_operand.hbm [shape: f32[16,16], index: 6, kind: input, shape index: {}]
  %s7 = inlined_call_operand.vmem [shape: f32[1,16], index: 7, kind: input, shape index: {}]
  %s8 = inlined_call_operand.vmem [shape: f32[16,32], index: 8, kind: output, shape index: {}]
  %s9 = sld [smem:[#allocation0]]
  $region54: #{_lambda_.1} parent=0
    _
  %s11 = ssub.s32 1, %s9
  %s12 = scalar_select 0, %s11, %s9
  $region1: #{_lambda_.1} parent=0
    #allocation3 [shape = 'u8[16384]{0}', space=vmem, size = 0x4000, scoped, tag = 'input window, operand 3, single buffered']
    #allocation4 [shape = 's32[1]{0}', space=sflag, size = 0x4, scoped, tag = 'scoped memory for _lambda_.1']
    #allocation5 [shape = 'u8[8192]{0}', space=vmem, size = 0x2000, scoped, tag = 'input window, operand 4, single buffered']
    #allocation6 [shape = 's32[1]{0}', space=sflag, size = 0x4, scoped, tag = 'scoped memory for _lambda_.1']
    #allocation7 [shape = 'u8[8192]{0}', space=vmem, size = 0x2000, scoped, tag = 'input window, operand 6, single buffered']
    %13 = vsyncpa [#allocation4], 0
    %14 = vsyncpa [#allocation6], 0
    // Predicated region
    $region2: #{_lambda_.1} parent=1 // pred_check
      _
    $region3: #{_lambda_.1} parent=1 // pred_check_branch
      %16 = sbr.rel (0) target = $region5
    $region4: #{_lambda_.1} parent=1 // pred_region
      _
    $region5: #{_lambda_.1} parent=1 // pred_fallthru
      _
    // Predicated region
    $region6: #{_lambda_.1} parent=1 // pred_check
      _
    $region7: #{_lambda_.1} parent=1 // pred_check_branch
      %18 = sbr.rel (0) target = $region9
    $region8: #{_lambda_.1} parent=1 // pred_region
      _
    $region9: #{_lambda_.1} parent=1 // pred_fallthru
      _
    // Predicated region
    $region10: #{_lambda_.1} parent=1 // pred_check
      _
    $region11: #{_lambda_.1} parent=1 // pred_check_branch
      %20 = sbr.rel (0) target = $region13
    $region12: #{_lambda_.1} parent=1 // pred_region
      _
    $region13: #{_lambda_.1} parent=1 // pred_fallthru
      _
    // Predicated region
    $region14: #{_lambda_.1} parent=1 // pred_check
      _
    $region15: #{_lambda_.1} parent=1 // pred_check_branch
      %22 = sbr.rel (0) target = $region17
    $region16: #{_lambda_.1} parent=1 // pred_region
      %24 = vsyncadd [#allocation4], 0
      %s25 = sshll.u32 %s3, 4
      %s26 = int_to_ptr.hbm [resolvable:$true] %s25
      %s27 = sshll.u32 [#allocation3], 4
      %s28 = int_to_ptr.vmem [resolvable:$true] %s27
      %33 = dma.hbm_to_vmem [thread:$0]  %s26, 512, %s28, [#allocation4], 128, 128, 8
    $region17: #{_lambda_.1} parent=1 // pred_fallthru
      _
    // Predicated region
    $region18: #{_lambda_.1} parent=1 // pred_check
      _
    $region19: #{_lambda_.1} parent=1 // pred_check_branch
      %35 = sbr.rel (0) target = $region21
    $region20: #{_lambda_.1} parent=1 // pred_region
      %37 = vsyncadd [#allocation6], 0
      %s38 = sshll.u32 %s4, 4
      %s39 = int_to_ptr.hbm [resolvable:$true] %s38
      %s40 = sshll.u32 [#allocation5], 4
      %s41 = int_to_ptr.vmem [resolvable:$true] %s40
      %46 = dma.hbm_to_vmem [thread:$0]  %s39, 256, %s41, [#allocation6], 128, 128, 8
    $region21: #{_lambda_.1} parent=1 // pred_fallthru
      _
    // Predicated region
    $region22: #{_lambda_.1} parent=1 // pred_check
      _
    $region23: #{_lambda_.1} parent=1 // pred_check_branch
      %48 = sbr.rel (0) target = $region25
    $region24: #{_lambda_.1} parent=1 // pred_region
      _
    $region25: #{_lambda_.1} parent=1 // pred_fallthru
      _
    // Predicated region
    $region26: #{_lambda_.1} parent=1 // pred_check
      _
    $region27: #{_lambda_.1} parent=1 // pred_check_branch
      %50 = sbr.rel (0) target = $region29
    $region28: #{_lambda_.1} parent=1 // pred_region
      %52 = vsyncadd [#allocation6], 0
      %s53 = sshll.u32 %s6, 4
      %s54 = int_to_ptr.hbm [resolvable:$true] %s53
      %s55 = sshll.u32 [#allocation7], 4
      %s56 = int_to_ptr.vmem [resolvable:$true] %s55
      %61 = dma.hbm_to_vmem [thread:$0]  %s54, 256, %s56, [#allocation6], 128, 128, 8
    $region29: #{_lambda_.1} parent=1 // pred_fallthru
      _
    // Predicated region
    $region30: #{_lambda_.1} parent=1 // pred_check
      _
    $region31: #{_lambda_.1} parent=1 // pred_check_branch
      %63 = sbr.rel (0) target = $region33
    $region32: #{_lambda_.1} parent=1 // pred_region
      _
    $region33: #{_lambda_.1} parent=1 // pred_fallthru
      _
    // Predicated region
    $region34: #{_lambda_.1} parent=1 // pred_check
      _
    $region35: #{_lambda_.1} parent=1 // pred_check_branch
      %65 = sbr.rel (0) target = $region37
    $region36: #{_lambda_.1} parent=1 // pred_region
      %67 = dma.done [#allocation4], 512
    $region37: #{_lambda_.1} parent=1 // pred_fallthru
      _
    // Predicated region
    $region38: #{_lambda_.1} parent=1 // pred_check
      _
    $region39: #{_lambda_.1} parent=1 // pred_check_branch
      %69 = sbr.rel (0) target = $region41
    $region40: #{_lambda_.1} parent=1 // pred_region
      %71 = dma.done [#allocation6], 256
    $region41: #{_lambda_.1} parent=1 // pred_fallthru
      _
    // Predicated region
    $region42: #{_lambda_.1} parent=1 // pred_check
      _
    $region43: #{_lambda_.1} parent=1 // pred_check_branch
      %73 = sbr.rel (0) target = $region45
    $region44: #{_lambda_.1} parent=1 // pred_region
      %75 = dma.done [#allocation6], 256
    $region45: #{_lambda_.1} parent=1 // pred_fallthru
      _
    %v76 = vld [vmem:[%s1] sm:$0x3]
    %v77 = vld [vmem:[#allocation5] sm:$0xff]
    %v78 = vld [vmem:[#allocation5 + $0x8] sm:$0xff]
    %vm79 = vcmask 130048
    %v81 = vsel %vm79, %v76, 0
    %83 = vmatpush.msra.mxu0 0.0
    %84 = vmatpush.msra.mxu0 0.0
    %85 = vmatpush.msra.mxu0 0.0
    %86 = vmatpush.msra.mxu0 0.0
    %87 = vmatpush.msra.mxu0 0.0
    %88 = vmatpush.msra.mxu0 0.0
    %89 = vmatpush.msra.mxu0 0.0
    %90 = vmatpush.msra.mxu0 0.0
    %91 = vmatpush.msra.mxu0 0.0
    %92 = vmatpush.msra.mxu0 0.0
    %93 = vmatpush.msra.mxu0 0.0
    %94 = vmatpush.msra.mxu0 0.0
    %95 = vmatpush.msra.mxu0 0.0
    %96 = vmatpush.msra.mxu0 0.0
    %97 = vmatpush.msra.mxu0 %v78
    %98 = vmatpush.msra.mxu0 %v77
    %99 = vmatmul.f32.gmra.mxu0 %v81
    %v100 = vpop.f32.mrf.mxu0
    %v101 = vadd.f32 0.0, %v100
    %102 = vdwg.mxu0
    %v103 = vld [vmem:[%s0] sm:$0xff]
    %v104 = vld [vmem:[%s0 + $0x8] sm:$0xff]
    %v105 = vld [vmem:[#allocation3] sm:$0xff]
    %v106 = vld [vmem:[#allocation3 + $0x8] sm:$0xff]
    %v107 = vld [vmem:[#allocation3 + $0x10] sm:$0xff]
    %v108 = vld [vmem:[#allocation3 + $0x18] sm:$0xff]
    %v109 = vld [vmem:[%s2] sm:$0xff]
    %v110 = vld [vmem:[%s2 + $0x8] sm:$0xff]
    %vm111 = vcmask 15360
    %v113 = vsel %vm111, %v109, 0
    %v116 = vsel %vm111, %v110, 0
    %vm118 = vcmask 1041408
    %v120 = vsel %vm118, %v101, 0
    %122 = vmatpush.msra.mxu0 0.0
    %123 = vmatpush.msra.mxu0 0.0
    %124 = vmatpush.msra.mxu0 0.0
    %125 = vmatpush.msra.mxu0 0.0
    %126 = vmatpush.msra.mxu0 0.0
    %127 = vmatpush.msra.mxu0 0.0
    %128 = vmatpush.msra.mxu0 0.0
    %129 = vmatpush.msra.mxu0 0.0
    %130 = vmatpush.msra.mxu0 0.0
    %131 = vmatpush.msra.mxu0 0.0
    %132 = vmatpush.msra.mxu0 0.0
    %133 = vmatpush.msra.mxu0 0.0
    %134 = vmatpush.msra.mxu0 0.0
    %135 = vmatpush.msra.mxu0 0.0
    %136 = vmatpush.msra.mxu0 0.0
    %137 = vmatpush.msra.mxu0 %v120
    %138 = vmatmul.f32.gmra.mxu0 %v113
    %v139 = vpop.f32.mrf.mxu0
    %v140 = vadd.f32 0.0, %v139
    %141 = vmatmul.f32.gmra.mxu0 %v116
    %v142 = vpop.f32.mrf.mxu0
    %v143 = vadd.f32 0.0, %v142
    %144 = vdwg.mxu0
    %vm145 = vcmask 261120
    %v147 = vsel %vm145, %v103, 0
    %v150 = vsel %vm145, %v104, 0
    %152 = vmatpush.msra.mxu0 0.0
    %153 = vmatpush.msra.mxu0 0.0
    %154 = vmatpush.msra.mxu0 0.0
    %155 = vmatpush.msra.mxu0 0.0
    %156 = vmatpush.msra.mxu0 0.0
    %157 = vmatpush.msra.mxu0 0.0
    %158 = vmatpush.msra.mxu0 0.0
    %159 = vmatpush.msra.mxu0 0.0
    %160 = vmatpush.msra.mxu0 0.0
    %161 = vmatpush.msra.mxu0 0.0
    %162 = vmatpush.msra.mxu0 0.0
    %163 = vmatpush.msra.mxu0 0.0
    %164 = vmatpush.msra.mxu0 %v108
    %165 = vmatpush.msra.mxu0 %v107
    %166 = vmatpush.msra.mxu0 %v106
    %167 = vmatpush.msra.mxu0 %v105
    %168 = vmatmul.f32.gmra.mxu0 %v147
    %v169 = vpop.f32.mrf.mxu0
    %v170 = vadd.f32 %v140, %v169
    %171 = vmatmul.f32.gmra.mxu0 %v150
    %v172 = vpop.f32.mrf.mxu0
    %v173 = vadd.f32 %v143, %v172
    %174 = vdwg.mxu0
    %v175 = vld [vmem:[%s5] sm:$0x1]
    %v177 = vperm.slane %v175, 0
    %v179 = vadd.f32 %v170, %v177
    %v180 = vadd.f32 %v173, %v177
    %vm181 = vcmask 785408
    %182 = vst.msk [vmem:[#allocation2] sm:$0xff] %vm181, %v179
    %183 = vst.msk [vmem:[#allocation2 + $0x8] sm:$0xff] %vm181, %v180
    %v184 = vld [vmem:[#allocation7] sm:$0xff]
    %v185 = vld [vmem:[#allocation7 + $0x8] sm:$0xff]
    %v186 = vld [vmem:[%s7] sm:$0x1]
    %v188 = vperm.slane %v186, 0
    %v190 = vld [vmem:[#allocation2] sm:$0xff]
    %192 = vrot.lane.b32.xlu0 %v190, 96
    %v193 = vpop.permute.xlu0 %192
    %v194 = vsel %vm79, %v190, 0
    %v196 = vsel %vm79, %v193, 0
    %198 = vmatpush.xpose.msra.mxu0 0.0
    %199 = vmatpush.xpose.msra.mxu0 0.0
    %200 = vmatpush.xpose.msra.mxu0 0.0
    %201 = vmatpush.xpose.msra.mxu0 0.0
    %202 = vmatpush.xpose.msra.mxu0 0.0
    %203 = vmatpush.xpose.msra.mxu0 0.0
    %204 = vmatpush.xpose.msra.mxu0 0.0
    %205 = vmatpush.xpose.msra.mxu0 0.0
    %206 = vmatpush.xpose.msra.mxu0 0.0
    %207 = vmatpush.xpose.msra.mxu0 0.0
    %208 = vmatpush.xpose.msra.mxu0 0.0
    %209 = vmatpush.xpose.msra.mxu0 0.0
    %210 = vmatpush.xpose.msra.mxu0 0.0
    %211 = vmatpush.xpose.msra.mxu0 0.0
    %212 = vmatpush.xpose.msra.mxu0 0.0
    %213 = vmatpush.xpose.msra.mxu0 %v196
    %214 = vmatmul.f32.gmra.mxu0 %v194
    %v215 = vpop.f32.mrf.mxu0
    %v216 = vadd.f32 0.0, %v215
    %217 = vdwg.mxu0
    %vm218 = vcmask 64512
    %v219 = vsel %vm218, %v216, -inf
    %220 = vmax.xlane.f32.xlu0 %v219
    %v221 = vpop.xlane.xlu0 %220
    %v222 = vsub.f32 %v216, %v221
    %v223 = vmul.f32 %v222, 1.442695
    %v224 = vpow.pop %v223
    %v225 = vsel %vm218, %v224, 0.0
    %226 = vadd.xlane.f32.xlu0 %v225
    %v227 = vpop.xlane.xlu0 %226
    %v228 = vrcp.pop %v227
    %v229 = vmul.f32 %v224, %v228
    %230 = vrot.lane.b32.xlu0 %v190, 64
    %v231 = vpop.permute.xlu0 %230
    %v234 = vsel %vm218, %v229, 0
    %236 = vmatpush.msra.mxu0 0.0
    %237 = vmatpush.msra.mxu0 0.0
    %238 = vmatpush.msra.mxu0 0.0
    %239 = vmatpush.msra.mxu0 0.0
    %240 = vmatpush.msra.mxu0 0.0
    %241 = vmatpush.msra.mxu0 0.0
    %242 = vmatpush.msra.mxu0 0.0
    %243 = vmatpush.msra.mxu0 0.0
    %244 = vmatpush.msra.mxu0 0.0
    %245 = vmatpush.msra.mxu0 0.0
    %246 = vmatpush.msra.mxu0 0.0
    %247 = vmatpush.msra.mxu0 0.0
    %248 = vmatpush.msra.mxu0 0.0
    %249 = vmatpush.msra.mxu0 0.0
    %250 = vmatpush.msra.mxu0 0.0
    %251 = vmatpush.msra.mxu0 %v231
    %252 = vmatmul.f32.gmra.mxu0 %v234
    %v253 = vpop.f32.mrf.mxu0
    %v254 = vadd.f32 0.0, %v253
    %255 = vdwg.mxu0
    %v257 = vsel %vm79, %v254, 0
    %259 = vmatpush.msra.mxu0 0.0
    %260 = vmatpush.msra.mxu0 0.0
    %261 = vmatpush.msra.mxu0 0.0
    %262 = vmatpush.msra.mxu0 0.0
    %263 = vmatpush.msra.mxu0 0.0
    %264 = vmatpush.msra.mxu0 0.0
    %265 = vmatpush.msra.mxu0 0.0
    %266 = vmatpush.msra.mxu0 0.0
    %267 = vmatpush.msra.mxu0 0.0
    %268 = vmatpush.msra.mxu0 0.0
    %269 = vmatpush.msra.mxu0 0.0
    %270 = vmatpush.msra.mxu0 0.0
    %271 = vmatpush.msra.mxu0 0.0
    %272 = vmatpush.msra.mxu0 0.0
    %273 = vmatpush.msra.mxu0 %v185
    %274 = vmatpush.msra.mxu0 %v184
    %275 = vmatmul.f32.gmra.mxu0 %v257
    %v276 = vpop.f32.mrf.mxu0
    %v277 = vadd.f32 %v188, %v276
    %278 = vdwg.mxu0
    %v279 = vadd.f32 %v277, %v254
    %280 = vrot.lane.b32.xlu0 %v190, 112
    %v281 = vpop.permute.xlu0 %280
    %282 = vrot.lane.b32.xlu0 %v190, 80
    %v283 = vpop.permute.xlu0 %282
    %v284 = vsel %vm79, %v281, 0
    %v286 = vsel %vm79, %v283, 0
    %288 = vmatpush.xpose.msra.mxu0 0.0
    %289 = vmatpush.xpose.msra.mxu0 0.0
    %290 = vmatpush.xpose.msra.mxu0 0.0
    %291 = vmatpush.xpose.msra.mxu0 0.0
    %292 = vmatpush.xpose.msra.mxu0 0.0
    %293 = vmatpush.xpose.msra.mxu0 0.0
    %294 = vmatpush.xpose.msra.mxu0 0.0
    %295 = vmatpush.xpose.msra.mxu0 0.0
    %296 = vmatpush.xpose.msra.mxu0 0.0
    %297 = vmatpush.xpose.msra.mxu0 0.0
    %298 = vmatpush.xpose.msra.mxu0 0.0
    %299 = vmatpush.xpose.msra.mxu0 0.0
    %300 = vmatpush.xpose.msra.mxu0 0.0
    %301 = vmatpush.xpose.msra.mxu0 0.0
    %302 = vmatpush.xpose.msra.mxu0 0.0
    %303 = vmatpush.xpose.msra.mxu0 %v286
    %304 = vmatmul.f32.gmra.mxu0 %v284
    %v305 = vpop.f32.mrf.mxu0
    %v306 = vadd.f32 0.0, %v305
    %307 = vdwg.mxu0
    %v308 = vsel %vm218, %v306, -inf
    %309 = vmax.xlane.f32.xlu0 %v308
    %v310 = vpop.xlane.xlu0 %309
    %v311 = vsub.f32 %v306, %v310
    %v312 = vmul.f32 %v311, 1.442695
    %v313 = vpow.pop %v312
    %v314 = vsel %vm218, %v313, 0.0
    %315 = vadd.xlane.f32.xlu0 %v314
    %v316 = vpop.xlane.xlu0 %315
    %v317 = vrcp.pop %v316
    %v318 = vmul.f32 %v313, %v317
    %319 = vrot.lane.b32.xlu0 %v190, 48
    %v320 = vpop.permute.xlu0 %319
    %v323 = vsel %vm218, %v318, 0
    %325 = vmatpush.msra.mxu0 0.0
    %326 = vmatpush.msra.mxu0 0.0
    %327 = vmatpush.msra.mxu0 0.0
    %328 = vmatpush.msra.mxu0 0.0
    %329 = vmatpush.msra.mxu0 0.0
    %330 = vmatpush.msra.mxu0 0.0
    %331 = vmatpush.msra.mxu0 0.0
    %332 = vmatpush.msra.mxu0 0.0
    %333 = vmatpush.msra.mxu0 0.0
    %334 = vmatpush.msra.mxu0 0.0
    %335 = vmatpush.msra.mxu0 0.0
    %336 = vmatpush.msra.mxu0 0.0
    %337 = vmatpush.msra.mxu0 0.0
    %338 = vmatpush.msra.mxu0 0.0
    %339 = vmatpush.msra.mxu0 0.0
    %340 = vmatpush.msra.mxu0 %v320
    %341 = vmatmul.f32.gmra.mxu0 %v323
    %v342 = vpop.f32.mrf.mxu0
    %v343 = vadd.f32 0.0, %v342
    %344 = vdwg.mxu0
    %v346 = vsel %vm79, %v343, 0
    %348 = vmatpush.msra.mxu0 0.0
    %349 = vmatpush.msra.mxu0 0.0
    %350 = vmatpush.msra.mxu0 0.0
    %351 = vmatpush.msra.mxu0 0.0
    %352 = vmatpush.msra.mxu0 0.0
    %353 = vmatpush.msra.mxu0 0.0
    %354 = vmatpush.msra.mxu0 0.0
    %355 = vmatpush.msra.mxu0 0.0
    %356 = vmatpush.msra.mxu0 0.0
    %357 = vmatpush.msra.mxu0 0.0
    %358 = vmatpush.msra.mxu0 0.0
    %359 = vmatpush.msra.mxu0 0.0
    %360 = vmatpush.msra.mxu0 0.0
    %361 = vmatpush.msra.mxu0 0.0
    %362 = vmatpush.msra.mxu0 %v185
    %363 = vmatpush.msra.mxu0 %v184
    %364 = vmatmul.f32.gmra.mxu0 %v346
    %v365 = vpop.f32.mrf.mxu0
    %v366 = vadd.f32 %v188, %v365
    %367 = vdwg.mxu0
    %v368 = vadd.f32 %v366, %v343
    %370 = vrot.lane.b32.xlu0 %v368, 16
    %v371 = vpop.permute.xlu0 %370
    %v373 = vsel %vm79, %v279, %v371
    %v374 = vld [vmem:[#allocation2 + $0x8] sm:$0xff]
    %376 = vrot.lane.b32.xlu0 %v374, 96
    %v377 = vpop.permute.xlu0 %376
    %v378 = vsel %vm79, %v374, 0
    %v380 = vsel %vm79, %v377, 0
    %382 = vmatpush.xpose.msra.mxu0 0.0
    %383 = vmatpush.xpose.msra.mxu0 0.0
    %384 = vmatpush.xpose.msra.mxu0 0.0
    %385 = vmatpush.xpose.msra.mxu0 0.0
    %386 = vmatpush.xpose.msra.mxu0 0.0
    %387 = vmatpush.xpose.msra.mxu0 0.0
    %388 = vmatpush.xpose.msra.mxu0 0.0
    %389 = vmatpush.xpose.msra.mxu0 0.0
    %390 = vmatpush.xpose.msra.mxu0 0.0
    %391 = vmatpush.xpose.msra.mxu0 0.0
    %392 = vmatpush.xpose.msra.mxu0 0.0
    %393 = vmatpush.xpose.msra.mxu0 0.0
    %394 = vmatpush.xpose.msra.mxu0 0.0
    %395 = vmatpush.xpose.msra.mxu0 0.0
    %396 = vmatpush.xpose.msra.mxu0 0.0
    %397 = vmatpush.xpose.msra.mxu0 %v380
    %398 = vmatmul.f32.gmra.mxu0 %v378
    %v399 = vpop.f32.mrf.mxu0
    %v400 = vadd.f32 0.0, %v399
    %401 = vdwg.mxu0
    %v402 = vsel %vm218, %v400, -inf
    %403 = vmax.xlane.f32.xlu0 %v402
    %v404 = vpop.xlane.xlu0 %403
    %v405 = vsub.f32 %v400, %v404
    %v406 = vmul.f32 %v405, 1.442695
    %v407 = vpow.pop %v406
    %v408 = vsel %vm218, %v407, 0.0
    %409 = vadd.xlane.f32.xlu0 %v408
    %v410 = vpop.xlane.xlu0 %409
    %v411 = vrcp.pop %v410
    %v412 = vmul.f32 %v407, %v411
    %413 = vrot.lane.b32.xlu0 %v374, 64
    %v414 = vpop.permute.xlu0 %413
    %v417 = vsel %vm218, %v412, 0
    %419 = vmatpush.msra.mxu0 0.0
    %420 = vmatpush.msra.mxu0 0.0
    %421 = vmatpush.msra.mxu0 0.0
    %422 = vmatpush.msra.mxu0 0.0
    %423 = vmatpush.msra.mxu0 0.0
    %424 = vmatpush.msra.mxu0 0.0
    %425 = vmatpush.msra.mxu0 0.0
    %426 = vmatpush.msra.mxu0 0.0
    %427 = vmatpush.msra.mxu0 0.0
    %428 = vmatpush.msra.mxu0 0.0
    %429 = vmatpush.msra.mxu0 0.0
    %430 = vmatpush.msra.mxu0 0.0
    %431 = vmatpush.msra.mxu0 0.0
    %432 = vmatpush.msra.mxu0 0.0
    %433 = vmatpush.msra.mxu0 0.0
    %434 = vmatpush.msra.mxu0 %v414
    %435 = vmatmul.f32.gmra.mxu0 %v417
    %v436 = vpop.f32.mrf.mxu0
    %v437 = vadd.f32 0.0, %v436
    %438 = vdwg.mxu0
    %v440 = vsel %vm79, %v437, 0
    %442 = vmatpush.msra.mxu0 0.0
    %443 = vmatpush.msra.mxu0 0.0
    %444 = vmatpush.msra.mxu0 0.0
    %445 = vmatpush.msra.mxu0 0.0
    %446 = vmatpush.msra.mxu0 0.0
    %447 = vmatpush.msra.mxu0 0.0
    %448 = vmatpush.msra.mxu0 0.0
    %449 = vmatpush.msra.mxu0 0.0
    %450 = vmatpush.msra.mxu0 0.0
    %451 = vmatpush.msra.mxu0 0.0
    %452 = vmatpush.msra.mxu0 0.0
    %453 = vmatpush.msra.mxu0 0.0
    %454 = vmatpush.msra.mxu0 0.0
    %455 = vmatpush.msra.mxu0 0.0
    %456 = vmatpush.msra.mxu0 %v185
    %457 = vmatpush.msra.mxu0 %v184
    %458 = vmatmul.f32.gmra.mxu0 %v440
    %v459 = vpop.f32.mrf.mxu0
    %v460 = vadd.f32 %v188, %v459
    %461 = vdwg.mxu0
    %v462 = vadd.f32 %v460, %v437
    %463 = vrot.lane.b32.xlu0 %v374, 112
    %v464 = vpop.permute.xlu0 %463
    %465 = vrot.lane.b32.xlu0 %v374, 80
    %v466 = vpop.permute.xlu0 %465
    %v467 = vsel %vm79, %v464, 0
    %v469 = vsel %vm79, %v466, 0
    %471 = vmatpush.xpose.msra.mxu0 0.0
    %472 = vmatpush.xpose.msra.mxu0 0.0
    %473 = vmatpush.xpose.msra.mxu0 0.0
    %474 = vmatpush.xpose.msra.mxu0 0.0
    %475 = vmatpush.xpose.msra.mxu0 0.0
    %476 = vmatpush.xpose.msra.mxu0 0.0
    %477 = vmatpush.xpose.msra.mxu0 0.0
    %478 = vmatpush.xpose.msra.mxu0 0.0
    %479 = vmatpush.xpose.msra.mxu0 0.0
    %480 = vmatpush.xpose.msra.mxu0 0.0
    %481 = vmatpush.xpose.msra.mxu0 0.0
    %482 = vmatpush.xpose.msra.mxu0 0.0
    %483 = vmatpush.xpose.msra.mxu0 0.0
    %484 = vmatpush.xpose.msra.mxu0 0.0
    %485 = vmatpush.xpose.msra.mxu0 0.0
    %486 = vmatpush.xpose.msra.mxu0 %v469
    %487 = vmatmul.f32.gmra.mxu0 %v467
    %v488 = vpop.f32.mrf.mxu0
    %v489 = vadd.f32 0.0, %v488
    %490 = vdwg.mxu0
    %v491 = vsel %vm218, %v489, -inf
    %492 = vmax.xlane.f32.xlu0 %v491
    %v493 = vpop.xlane.xlu0 %492
    %v494 = vsub.f32 %v489, %v493
    %v495 = vmul.f32 %v494, 1.442695
    %v496 = vpow.pop %v495
    %v497 = vsel %vm218, %v496, 0.0
    %498 = vadd.xlane.f32.xlu0 %v497
    %v499 = vpop.xlane.xlu0 %498
    %v500 = vrcp.pop %v499
    %v501 = vmul.f32 %v496, %v500
    %502 = vrot.lane.b32.xlu0 %v374, 48
    %v503 = vpop.permute.xlu0 %502
    %v506 = vsel %vm218, %v501, 0
    %508 = vmatpush.msra.mxu0 0.0
    %509 = vmatpush.msra.mxu0 0.0
    %510 = vmatpush.msra.mxu0 0.0
    %511 = vmatpush.msra.mxu0 0.0
    %512 = vmatpush.msra.mxu0 0.0
    %513 = vmatpush.msra.mxu0 0.0
    %514 = vmatpush.msra.mxu0 0.0
    %515 = vmatpush.msra.mxu0 0.0
    %516 = vmatpush.msra.mxu0 0.0
    %517 = vmatpush.msra.mxu0 0.0
    %518 = vmatpush.msra.mxu0 0.0
    %519 = vmatpush.msra.mxu0 0.0
    %520 = vmatpush.msra.mxu0 0.0
    %521 = vmatpush.msra.mxu0 0.0
    %522 = vmatpush.msra.mxu0 0.0
    %523 = vmatpush.msra.mxu0 %v503
    %524 = vmatmul.f32.gmra.mxu0 %v506
    %v525 = vpop.f32.mrf.mxu0
    %v526 = vadd.f32 0.0, %v525
    %527 = vdwg.mxu0
    %v529 = vsel %vm79, %v526, 0
    %531 = vmatpush.msra.mxu0 0.0
    %532 = vmatpush.msra.mxu0 0.0
    %533 = vmatpush.msra.mxu0 0.0
    %534 = vmatpush.msra.mxu0 0.0
    %535 = vmatpush.msra.mxu0 0.0
    %536 = vmatpush.msra.mxu0 0.0
    %537 = vmatpush.msra.mxu0 0.0
    %538 = vmatpush.msra.mxu0 0.0
    %539 = vmatpush.msra.mxu0 0.0
    %540 = vmatpush.msra.mxu0 0.0
    %541 = vmatpush.msra.mxu0 0.0
    %542 = vmatpush.msra.mxu0 0.0
    %543 = vmatpush.msra.mxu0 0.0
    %544 = vmatpush.msra.mxu0 0.0
    %545 = vmatpush.msra.mxu0 %v185
    %546 = vmatpush.msra.mxu0 %v184
    %547 = vmatmul.f32.gmra.mxu0 %v529
    %v548 = vpop.f32.mrf.mxu0
    %v549 = vadd.f32 %v188, %v548
    %550 = vdwg.mxu0
    %v551 = vadd.f32 %v549, %v526
    %553 = vrot.lane.b32.xlu0 %v551, 16
    %v554 = vpop.permute.xlu0 %553
    %v556 = vsel %vm79, %v462, %v554
    %557 = vst.msk [vmem:[%s8] sm:$0xff] %vm145, %v373
    %558 = vst.msk [vmem:[%s8 + $0x8] sm:$0xff] %vm145, %v556
    // Predicated region
    $region46: #{_lambda_.1} parent=1 // pred_check
      _
    $region47: #{_lambda_.1} parent=1 // pred_check_branch
      %560 = sbr.rel (0) target = $region49
    $region48: #{_lambda_.1} parent=1 // pred_region
      _
    $region49: #{_lambda_.1} parent=1 // pred_fallthru
      _
    // Predicated region
    $region50: #{_lambda_.1} parent=1 // pred_check
      _
    $region51: #{_lambda_.1} parent=1 // pred_check_branch
      %562 = sbr.rel (0) target = $region53
    $region52: #{_lambda_.1} parent=1 // pred_region
      _
    $region53: #{_lambda_.1} parent=1 // pred_fallthru
      _
    %563 = vsyncpa [#allocation4], 1
    %564 = vsyncpa [#allocation6], 1

</llo_original>
